<compile_context>
chip_gen: v7x
topology: tpu7x:2x2x1
jax: 0.10.0
libtpu: 0.0.40
codegen_flags: <defaults>
</compile_context>

<pallas_src>
import jax
import jax.numpy as jnp
from jax.experimental import pallas as pl
from jax.experimental.pallas import tpu as pltpu


_LANE = 128
_MAX_TM = 2048          # diminishing returns past this (already >85% of HBM roofline)


def _round_up(n, m):
    return ((n + m - 1) // m) * m


def _sublane(dtype):
    # f32 packs 8 rows per vreg sublane group, bf16/fp16 pack 16.
    return 16 if jnp.dtype(dtype).itemsize == 2 else 8


def _vmem_budgets():
    """Return (streamed-tile VMEM budget, scoped vmem_limit_bytes), chip-aware."""
    phys = None
    try:
        info = pltpu.get_tpu_info()
        phys = getattr(info, "vmem_capacity_bytes", None)
    except Exception:  # pragma: no cover - fall back to a v7x-safe setting
        phys = None
    if phys is None:
        phys = 64 << 20
    if phys >= (96 << 20):          # v5e / v6e: 128 MiB physical VMEM
        return 56 << 20, 96 << 20
    return 24 << 20, 48 << 20       # v7x: 64 MiB per TensorCore


def _choose_row_tile(B, E, H_pad, C_pad, x_dtype, out_dtype, w_dtype, tile_budget):
    """Largest batch-row tile whose buffers fit the VMEM budget, with >=4 grid steps
    when the batch is big enough for pipelining / megacore sharding to matter."""
    sub = _sublane(x_dtype)
    xb = jnp.dtype(x_dtype).itemsize
    ob = jnp.dtype(out_dtype).itemsize
    wb = jnp.dtype(w_dtype).itemsize
    # Resident (constant index_map) weights/biases are still double-buffered by the pipeline;
    # charge them against the budget so a large E can't blow the VMEM limit.
    resident = 2 * (E * H_pad + H_pad + H_pad * C_pad + C_pad) * wb
    # Streamed x and out tiles are each double-buffered.
    per_row = 2 * E * xb + 2 * C_pad * ob
    avail = max(tile_budget - resident, sub * per_row)
    tm = max(sub, (avail // per_row) // sub * sub)
    tm = min(tm, _MAX_TM)
    tm = min(tm, _round_up(B, sub))              # never bigger than the batch (rounded up)
    # Aim for ~>=4 total grid steps when B allows it (>=2 iterations per v7x TC), but keep
    # tm as large as that allows rather than many tiny tiles.
    if B >= 4 * sub:
        tm = min(tm, _round_up(pl.cdiv(B, 4), sub))
    return max(tm, sub)


def _classification_head_kernel(x_ref, w1_ref, b1_ref, w2_ref, b2_ref, o_ref):
    # x_ref:  (tm, E)       streamed batch-row tile
    # w1_ref: (E, Hp)       resident (constant index_map)
    # b1_ref: (1, Hp)
    # w2_ref: (Hp, Cp)      Hp / Cp lane-padded to multiples of 128
    # b2_ref: (1, Cp)
    # o_ref:  (tm, Cp)
    h = jnp.dot(x_ref[...], w1_ref[...], preferred_element_type=jnp.float32)
    h = h + b1_ref[...].astype(jnp.float32)
    # LeakyReLU, PyTorch default negative_slope = 0.01 (VPU).
    h = jnp.where(h > 0, h, 0.01 * h)
    # Match the second matmul's operand dtype (bf16 weights -> bf16 LHS, f32 -> no-op cast);
    # accumulation stays f32 via preferred_element_type.
    h = h.astype(w2_ref.dtype)
    logits = jnp.dot(h, w2_ref[...], preferred_element_type=jnp.float32)
    logits = logits + b2_ref[...].astype(jnp.float32)
    o_ref[...] = logits.astype(o_ref.dtype)


def classification_head(x, w1, b1, w2, b2, *, tm=None):
    """x: [B, E]. w1: [E, 64], b1: [64] or [1, 64], w2: [64, C], b2: [C] or [1, C].

    Returns logits [B, C] in x.dtype.
    """
    B, E = x.shape
    H = w1.shape[1]
    C = w2.shape[1]
    assert w1.shape == (E, H) and w2.shape == (H, C)
    b1 = jnp.reshape(b1, (1, H))
    b2 = jnp.reshape(b2, (1, C))

    out_dtype = x.dtype
    # bf16/f16 activations -> cast weights to the same 16-bit dtype (MXU-native operands,
    # f32 accumulation kept). f32 activations keep f32 weights.
    w_dtype = x.dtype if jnp.dtype(x.dtype).itemsize == 2 else jnp.float32
    w1 = w1.astype(w_dtype)
    b1 = b1.astype(w_dtype)
    w2 = w2.astype(w_dtype)
    b2 = b2.astype(w_dtype)

    # Lane-pad the tiny dims: hidden H (64 -> 128) and class columns C (-> multiple of 128).
    # Zero padding is exact and makes the output store an unmasked full-lane vst.
    H_pad = _round_up(H, _LANE)
    C_pad = _round_up(C, _LANE)
    if H_pad != H:
        w1 = jnp.pad(w1, ((0, 0), (0, H_pad - H)))
        b1 = jnp.pad(b1, ((0, 0), (0, H_pad - H)))
        w2 = jnp.pad(w2, ((0, H_pad - H), (0, 0)))
    if C_pad != C:
        w2 = jnp.pad(w2, ((0, 0), (0, C_pad - C)))
        b2 = jnp.pad(b2, ((0, 0), (0, C_pad - C)))

    tile_budget, vmem_limit = _vmem_budgets()
    if tm is None:
        tm = _choose_row_tile(B, E, H_pad, C_pad, x.dtype, out_dtype, w_dtype, tile_budget)
    else:
        tm = _round_up(tm, _sublane(x.dtype))

    # Ragged batch: no jnp.pad of x (that would be a full extra HBM pass). The last block
    # may hang over the end of x/out; OOB input rows are don't-care, OOB output rows are
    # masked on writeback by Pallas.
    grid = (pl.cdiv(B, tm),)

    out = pl.pallas_call(
        _classification_head_kernel,
        out_shape=jax.ShapeDtypeStruct((B, C_pad), out_dtype),
        grid_spec=pltpu.PrefetchScalarGridSpec(
            num_scalar_prefetch=0,
            grid=grid,
            in_specs=[
                pl.BlockSpec((tm, E), lambda i: (i, 0)),         # x: tile over batch rows
                pl.BlockSpec((E, H_pad), lambda i: (0, 0)),      # W1: full, resident
                pl.BlockSpec((1, H_pad), lambda i: (0, 0)),      # b1
                pl.BlockSpec((H_pad, C_pad), lambda i: (0, 0)),  # W2 (lane-padded)
                pl.BlockSpec((1, C_pad), lambda i: (0, 0)),      # b2 (lane-padded)
            ],
            out_specs=pl.BlockSpec((tm, C_pad), lambda i: (i, 0)),
        ),
        compiler_params=pltpu.CompilerParams(
            dimension_semantics=("parallel",),    # batch axis shards across v7x's 2 TCs
            vmem_limit_bytes=vmem_limit,
        ),
    )(x, w1, b1, w2, b2)

    # Only a column slice remains (and only when C was actually lane-padded).
    return out if C_pad == C else out[:, :C]


def init_params(key, embed_size, class_size, hidden=64):
    """Deterministic synthetic params (PyTorch Linear init, transposed layout)."""
    k1, k2, k3, k4 = jax.random.split(key, 4)
    s1 = 1.0 / jnp.sqrt(embed_size)
    s2 = 1.0 / jnp.sqrt(hidden)
    w1 = jax.random.uniform(k1, (embed_size, hidden), jnp.float32, -s1, s1)
    b1 = jax.random.uniform(k2, (1, hidden), jnp.float32, -s1, s1)
    w2 = jax.random.uniform(k3, (hidden, class_size), jnp.float32, -s2, s2)
    b2 = jax.random.uniform(k4, (1, class_size), jnp.float32, -s2, s2)
    return w1, b1, w2, b2


def reference(x, w1, b1, w2, b2):
    h = x @ w1 + b1.reshape(1, -1)
    h = jnp.where(h > 0, h, 0.01 * h)
    return h @ w2 + b2.reshape(1, -1)


if __name__ == "__main__":
    key = jax.random.PRNGKey(0)

    # Case 1: small shapes matching the module spec (batch=8, embed=32, classes=4).
    batch, embed_size, class_size = 8, 32, 4
    kx, kp, key = jax.random.split(key, 3)
    x = jax.random.normal(kx, (batch, embed_size), jnp.float32)
    w1, b1, w2, b2 = init_params(kp, embed_size, class_size)

    logits = jax.block_until_ready(classification_head(x, w1, b1, w2, b2))
    ref = reference(x, w1, b1, w2, b2)
    assert logits.shape == (batch, class_size)
    assert jnp.allclose(logits, ref, atol=1e-5, rtol=1e-5), "case1 mismatch vs reference"

    # Case 2: ragged batch + small class count -> exercises the non-divisible grid
    # (masked last-block writeback), lane-padded output, and a multi-step grid.
    batch2, embed2, class2 = 100, 256, 5
    kx2, kp2, key = jax.random.split(key, 3)
    x2 = jax.random.normal(kx2, (batch2, embed2), jnp.float32)
    p2 = init_params(kp2, embed2, class2)
    logits2 = jax.block_until_ready(classification_head(x2, *p2))
    ref2 = reference(x2, *p2)
    assert logits2.shape == (batch2, class2)
    assert jnp.allclose(logits2, ref2, atol=1e-4, rtol=1e-4), "case2 mismatch vs reference"

    # Case 3: bf16 activations -> bf16 weight path (f32 accumulation), loose tolerance.
    batch3, embed3, class3 = 64, 128, 3
    kx3, kp3 = jax.random.split(key)
    x3 = jax.random.normal(kx3, (batch3, embed3), jnp.float32).astype(jnp.bfloat16)
    p3 = init_params(kp3, embed3, class3)
    logits3 = jax.block_until_ready(classification_head(x3, *p3))
    p3_bf = tuple(p.astype(jnp.bfloat16).astype(jnp.float32) for p in p3)
    ref3 = reference(x3.astype(jnp.float32), *p3_bf)
    assert logits3.shape == (batch3, class3)
    assert jnp.allclose(logits3.astype(jnp.float32), ref3, atol=5e-2, rtol=5e-2), \
        "case3 mismatch vs reference"

    print("KERNEL_OK")
</pallas_src>

<mosaic_0001>
module attributes {stable_mosaic.version = 11 : i64} {
  func.func @_classification_head_kernel(%arg0: i32, %arg1: memref<8x32xf32, #tpu.memory_space<vmem>>, %arg2: memref<32x128xf32, #tpu.memory_space<vmem>>, %arg3: memref<1x128xf32, #tpu.memory_space<vmem>>, %arg4: memref<128x128xf32, #tpu.memory_space<vmem>>, %arg5: memref<1x128xf32, #tpu.memory_space<vmem>>, %arg6: memref<8x128xf32, #tpu.memory_space<vmem>>) attributes {dimension_semantics = [#tpu.dimension_semantics<parallel>], iteration_bounds = array<i64: 1>, scalar_prefetch = 0 : i64, scratch_operands = 0 : i64, tpu.core_type = #tpu.core_type<tc>, window_params = [{transform_indices = @transform_0, window_bounds = array<i64: 8, 32>}, {pipeline_mode = #tpu.pipeline_mode<synchronous>, transform_indices = @transform_1, window_bounds = array<i64: 32, 128>}, {pipeline_mode = #tpu.pipeline_mode<synchronous>, transform_indices = @transform_2, window_bounds = array<i64: 1, 128>}, {pipeline_mode = #tpu.pipeline_mode<synchronous>, transform_indices = @transform_3, window_bounds = array<i64: 128, 128>}, {pipeline_mode = #tpu.pipeline_mode<synchronous>, transform_indices = @transform_4, window_bounds = array<i64: 1, 128>}, {transform_indices = @transform_5, window_bounds = array<i64: 8, 128>}]} {
    %c0 = arith.constant 0 : index
    %c0_0 = arith.constant 0 : index
    %0 = vector.load %arg1[%c0, %c0_0] : memref<8x32xf32, #tpu.memory_space<vmem>>, vector<8x32xf32>
    %c0_1 = arith.constant 0 : index
    %c0_2 = arith.constant 0 : index
    %1 = vector.load %arg2[%c0_1, %c0_2] : memref<32x128xf32, #tpu.memory_space<vmem>>, vector<32x128xf32>
    %cst = arith.constant dense<0.000000e+00> : vector<8x128xf32>
    %2 = tpu.matmul %0, %1, %cst {dimension_numbers = #tpu.dot_dimension_numbers<[1], [0], [0], [1], [0, 0, 1, 1], [], []>} : vector<8x32xf32>, vector<32x128xf32>, vector<8x128xf32> -> vector<8x128xf32>
    %c0_3 = arith.constant 0 : index
    %c0_4 = arith.constant 0 : index
    %3 = vector.load %arg3[%c0_3, %c0_4] : memref<1x128xf32, #tpu.memory_space<vmem>>, vector<1x128xf32>
    %4 = vector.broadcast %3 : vector<1x128xf32> to vector<8x128xf32>
    %5 = arith.addf %2, %4 : vector<8x128xf32>
    %cst_5 = arith.constant 0.000000e+00 : f32
    %6 = vector.broadcast %cst_5 : f32 to vector<8x128xf32>
    %7 = arith.cmpf ogt, %5, %6 : vector<8x128xf32>
    %cst_6 = arith.constant 0.00999999977 : f32
    %8 = vector.broadcast %cst_6 : f32 to vector<8x128xf32>
    %9 = arith.mulf %8, %5 : vector<8x128xf32>
    %10 = arith.select %7, %5, %9 : vector<8x128xi1>, vector<8x128xf32>
    %c0_7 = arith.constant 0 : index
    %c0_8 = arith.constant 0 : index
    %11 = vector.load %arg4[%c0_7, %c0_8] : memref<128x128xf32, #tpu.memory_space<vmem>>, vector<128x128xf32>
    %cst_9 = arith.constant dense<0.000000e+00> : vector<8x128xf32>
    %12 = tpu.matmul %10, %11, %cst_9 {dimension_numbers = #tpu.dot_dimension_numbers<[1], [0], [0], [1], [0, 0, 1, 1], [], []>} : vector<8x128xf32>, vector<128x128xf32>, vector<8x128xf32> -> vector<8x128xf32>
    %c0_10 = arith.constant 0 : index
    %c0_11 = arith.constant 0 : index
    %13 = vector.load %arg5[%c0_10, %c0_11] : memref<1x128xf32, #tpu.memory_space<vmem>>, vector<1x128xf32>
    %14 = vector.broadcast %13 : vector<1x128xf32> to vector<8x128xf32>
    %15 = arith.addf %12, %14 : vector<8x128xf32>
    %c0_12 = arith.constant 0 : index
    %c0_13 = arith.constant 0 : index
    %16 = vector.load %arg6[%c0_12, %c0_13] : memref<8x128xf32, #tpu.memory_space<vmem>>, vector<8x128xf32>
    tpu.vector_store %arg6[%c0_12, %c0_13], %15 {strides = array<i32>} : memref<8x128xf32, #tpu.memory_space<vmem>>, vector<8x128xf32>,
    return
  }
  func.func @transform_0(%arg0: i32) -> (i32, i32) {
    %c0_i32 = arith.constant 0 : i32
    %c0_i32_0 = arith.constant 0 : i32
    return %arg0, %c0_i32 : i32, i32
  }
  func.func @transform_1(%arg0: i32) -> (i32, i32) {
    %c0_i32 = arith.constant 0 : i32
    %c0_i32_0 = arith.constant 0 : i32
    %c0_i32_1 = arith.constant 0 : i32
    return %c0_i32, %c0_i32_0 : i32, i32
  }
  func.func @transform_2(%arg0: i32) -> (i32, i32) {
    %c0_i32 = arith.constant 0 : i32
    %c0_i32_0 = arith.constant 0 : i32
    %c0_i32_1 = arith.constant 0 : i32
    return %c0_i32, %c0_i32_0 : i32, i32
  }
  func.func @transform_3(%arg0: i32) -> (i32, i32) {
    %c0_i32 = arith.constant 0 : i32
    %c0_i32_0 = arith.constant 0 : i32
    %c0_i32_1 = arith.constant 0 : i32
    return %c0_i32, %c0_i32_0 : i32, i32
  }
  func.func @transform_4(%arg0: i32) -> (i32, i32) {
    %c0_i32 = arith.constant 0 : i32
    %c0_i32_0 = arith.constant 0 : i32
    %c0_i32_1 = arith.constant 0 : i32
    return %c0_i32, %c0_i32_0 : i32, i32
  }
  func.func @transform_5(%arg0: i32) -> (i32, i32) {
    %c0_i32 = arith.constant 0 : i32
    %c0_i32_0 = arith.constant 0 : i32
    return %arg0, %c0_i32 : i32, i32
  }
}

</mosaic_0001>

<llo_original>
// kernel: tpu_custom_call.1
$region0: #{tpu_custom_call.1}
  #allocation0 [shape = 'u32[]', space=smem, size = 0x4, offset = 0x4, fixed_abs, tag = 'smem constant byte address 0x4 - core index']
  #allocation1 [shape = 'u32[144,128]{1,0:T(1,128)}', space=vmem, size = 0x12000, scoped, tag = 'internal scratch']
  %s0 = inlined_call_operand.hbm [shape: f32[8,32], index: 0, kind: input, shape index: {}]
  %s1 = inlined_call_operand.hbm [shape: f32[32,128], index: 1, kind: input, shape index: {}]
  %s2 = inlined_call_operand.vmem [shape: f32[1,128], index: 2, kind: input, shape index: {}]
  %s3 = inlined_call_operand.hbm [shape: f32[128,128], index: 3, kind: input, shape index: {}]
  %s4 = inlined_call_operand.vmem [shape: f32[1,128], index: 4, kind: input, shape index: {}]
  %s5 = inlined_call_operand.hbm [shape: f32[8,128], index: 5, kind: output, shape index: {}]
  %s6 = sld [smem:[#allocation0]]
  $region42: #{tpu_custom_call.1} parent=0
    _
  %s8 = ssub.s32 1, %s6
  %s9 = scalar_select 0, %s8, %s6
  $region1: #{tpu_custom_call.1} parent=0
    #allocation2 [shape = 'u8[4096]{0}', space=vmem, size = 0x1000, scoped, tag = 'input window, operand 0, single buffered']
    #allocation3 [shape = 's32[1]{0}', space=sflag, size = 0x4, scoped, tag = 'scoped memory for tpu_custom_call.1']
    #allocation4 [shape = 's32[1]{0}', space=sflag, size = 0x4, scoped, tag = 'scoped memory for tpu_custom_call.1']
    #allocation5 [shape = 'u8[16384]{0}', space=vmem, size = 0x4000, scoped, tag = 'input window, operand 1, single buffered']
    #allocation6 [shape = 's32[1]{0}', space=sflag, size = 0x4, scoped, tag = 'scoped memory for tpu_custom_call.1']
    #allocation7 [shape = 'u8[65536]{0}', space=vmem, size = 0x10000, scoped, tag = 'input window, operand 3, single buffered']
    #allocation8 [shape = 'u8[4096]{0}', space=vmem, size = 0x1000, scoped, tag = 'output window, operand 0, single buffered']
    %10 = vsyncpa [#allocation3], 0
    %11 = vsyncpa [#allocation6], 0
    %12 = vsyncpa [#allocation4], 0
    // Predicated region
    $region2: #{tpu_custom_call.1} parent=1 // pred_check
      _
    $region3: #{tpu_custom_call.1} parent=1 // pred_check_branch
      %14 = sbr.rel (0) target = $region5
    $region4: #{tpu_custom_call.1} parent=1 // pred_region
      %s16 = ssub.s32 128, 128
      %17 = vsyncadd [#allocation3], %s16
      %s19 = sshll.u32 [#allocation2], 4
      %s20 = int_to_ptr.vmem [resolvable:$true] %s19
      %22 = dma.hbm_to_vmem [thread:$0]  %s0, 128, %s20, [#allocation3]
    $region5: #{tpu_custom_call.1} parent=1 // pred_fallthru
      _
    // Predicated region
    $region6: #{tpu_custom_call.1} parent=1 // pred_check
      _
    $region7: #{tpu_custom_call.1} parent=1 // pred_check_branch
      %24 = sbr.rel (0) target = $region9
    $region8: #{tpu_custom_call.1} parent=1 // pred_region
      %s26 = ssub.s32 512, 512
      %27 = vsyncadd [#allocation6], %s26
      %s28 = sshll.u32 [#allocation5], 4
      %s29 = int_to_ptr.vmem [resolvable:$true] %s28
      %34 = dma.hbm_to_vmem [thread:$0]  %s1, 512, %s29, [#allocation6], 128, 128, 8
    $region9: #{tpu_custom_call.1} parent=1 // pred_fallthru
      _
    // Predicated region
    $region10: #{tpu_custom_call.1} parent=1 // pred_check
      _
    $region11: #{tpu_custom_call.1} parent=1 // pred_check_branch
      %36 = sbr.rel (0) target = $region13
    $region12: #{tpu_custom_call.1} parent=1 // pred_region
      _
    $region13: #{tpu_custom_call.1} parent=1 // pred_fallthru
      _
    // Predicated region
    $region14: #{tpu_custom_call.1} parent=1 // pred_check
      _
    $region15: #{tpu_custom_call.1} parent=1 // pred_check_branch
      %38 = sbr.rel (0) target = $region17
    $region16: #{tpu_custom_call.1} parent=1 // pred_region
      %s40 = ssub.s32 2048, 2048
      %41 = vsyncadd [#allocation6], %s40
      %s42 = sshll.u32 [#allocation7], 4
      %s43 = int_to_ptr.vmem [resolvable:$true] %s42
      %48 = dma.hbm_to_vmem [thread:$0]  %s3, 2048, %s43, [#allocation6], 128, 128, 8
    $region17: #{tpu_custom_call.1} parent=1 // pred_fallthru
      _
    // Predicated region
    $region18: #{tpu_custom_call.1} parent=1 // pred_check
      _
    $region19: #{tpu_custom_call.1} parent=1 // pred_check_branch
      %50 = sbr.rel (0) target = $region21
    $region20: #{tpu_custom_call.1} parent=1 // pred_region
      _
    $region21: #{tpu_custom_call.1} parent=1 // pred_fallthru
      _
    // Predicated region
    $region22: #{tpu_custom_call.1} parent=1 // pred_check
      _
    $region23: #{tpu_custom_call.1} parent=1 // pred_check_branch
      %52 = sbr.rel (0) target = $region25
    $region24: #{tpu_custom_call.1} parent=1 // pred_region
      %53 = dma.done [#allocation3], 128
    $region25: #{tpu_custom_call.1} parent=1 // pred_fallthru
      _
    // Predicated region
    $region26: #{tpu_custom_call.1} parent=1 // pred_check
      _
    $region27: #{tpu_custom_call.1} parent=1 // pred_check_branch
      %55 = sbr.rel (0) target = $region29
    $region28: #{tpu_custom_call.1} parent=1 // pred_region
      %56 = dma.done [#allocation6], 512
    $region29: #{tpu_custom_call.1} parent=1 // pred_fallthru
      _
    // Predicated region
    $region30: #{tpu_custom_call.1} parent=1 // pred_check
      _
    $region31: #{tpu_custom_call.1} parent=1 // pred_check_branch
      %58 = sbr.rel (0) target = $region33
    $region32: #{tpu_custom_call.1} parent=1 // pred_region
      %59 = dma.done [#allocation6], 2048
    $region33: #{tpu_custom_call.1} parent=1 // pred_fallthru
      _
    %v60 = vld [vmem:[#allocation2] sm:$0xff]
    %v61 = vld [vmem:[#allocation5] sm:$0xff]
    %v62 = vld [vmem:[#allocation5 + $0x8] sm:$0xff]
    %v63 = vld [vmem:[#allocation5 + $0x10] sm:$0xff]
    %v64 = vld [vmem:[#allocation5 + $0x18] sm:$0xff]
    %v65 = vld [vmem:[%s2] sm:$0x1]
    %v67 = vlaneseq
    %v68 = vshrl.u32 %v67, 7
    %v69 = vsub.s32 0, %v68
    %v70 = vrot.slane %v65, %v69
    %vm72 = vcmask 261120
    %v74 = vsel %vm72, %v60, 0
    %76 = vmatprep.subr.mxu0 0.0
    %77 = vmatpush1.msra.mxu0 %v61
    %78 = vmatprep.subr.mxu0 0.0
    %79 = vmatpush1.msra.mxu0 %v62
    %80 = vmatprep.subr.mxu0 0.0
    %81 = vmatpush1.msra.mxu0 %v63
    %82 = vmatprep.subr.mxu0 0.0
    %83 = vmatpush1.msra.mxu0 %v64
    %84 = vmatprep.subr.mxu0 0.0
    %85 = vmatpush1.msra.mxu0 0.0
    %86 = vmatprep.subr.mxu0 0.0
    %87 = vmatpush1.msra.mxu0 0.0
    %88 = vmatprep.subr.mxu0 0.0
    %89 = vmatpush1.msra.mxu0 0.0
    %90 = vmatprep.subr.mxu0 0.0
    %91 = vmatpush1.msra.mxu0 0.0
    %92 = vmatprep.subr.mxu0 0.0
    %93 = vmatpush1.msra.mxu0 0.0
    %94 = vmatprep.subr.mxu0 0.0
    %95 = vmatpush1.msra.mxu0 0.0
    %96 = vmatprep.subr.mxu0 0.0
    %97 = vmatpush1.msra.mxu0 0.0
    %98 = vmatprep.subr.mxu0 0.0
    %99 = vmatpush1.msra.mxu0 0.0
    %100 = vmatprep.subr.mxu0 0.0
    %101 = vmatpush1.msra.mxu0 0.0
    %102 = vmatprep.subr.mxu0 0.0
    %103 = vmatpush1.msra.mxu0 0.0
    %104 = vmatprep.subr.mxu0 0.0
    %105 = vmatpush1.msra.mxu0 0.0
    %106 = vmatprep.subr.mxu0 0.0
    %107 = vmatpush1.msra.mxu0 0.0
    %108 = vmatprep.subr.mxu0 0.0
    %109 = vmatpush1.msra.mxu0 0.0
    %110 = vmatprep.subr.mxu0 0.0
    %111 = vmatpush1.msra.mxu0 0.0
    %112 = vmatprep.subr.mxu0 0.0
    %113 = vmatpush1.msra.mxu0 0.0
    %114 = vmatprep.subr.mxu0 0.0
    %115 = vmatpush1.msra.mxu0 0.0
    %116 = vmatprep.subr.mxu0 0.0
    %117 = vmatpush1.msra.mxu0 0.0
    %118 = vmatprep.subr.mxu0 0.0
    %119 = vmatpush1.msra.mxu0 0.0
    %120 = vmatprep.subr.mxu0 0.0
    %121 = vmatpush1.msra.mxu0 0.0
    %122 = vmatprep.subr.mxu0 0.0
    %123 = vmatpush1.msra.mxu0 0.0
    %124 = vmatprep.subr.mxu0 0.0
    %125 = vmatpush1.msra.mxu0 0.0
    %126 = vmatprep.subr.mxu0 0.0
    %127 = vmatpush1.msra.mxu0 0.0
    %128 = vmatprep.subr.mxu0 0.0
    %129 = vmatpush1.msra.mxu0 0.0
    %130 = vmatprep.subr.mxu0 0.0
    %131 = vmatpush1.msra.mxu0 0.0
    %132 = vmatprep.subr.mxu0 0.0
    %133 = vmatpush1.msra.mxu0 0.0
    %134 = vmatprep.subr.mxu0 0.0
    %135 = vmatpush1.msra.mxu0 0.0
    %136 = vmatprep.subr.mxu0 0.0
    %137 = vmatpush1.msra.mxu0 0.0
    %138 = vmatprep.subr.mxu0 0.0
    %139 = vmatpush1.msra.mxu0 0.0
    %140 = vmatprep.mubr.f32.mxu0 0.0
    %141 = vmatmul.mubr.f32.gmra.mrb[0].mxu0 %v74
    %v142 = vpop.f32.mrb[0].mxu0
    %v143 = vadd.f32 %v70, %v142
    %v144 = vpop.f32.mrb[0].mxu0
    %145 = vdwg.mxu0
    %vm146 = vcmp.gt.f32.partialorder %v143, 0.0
    %v147 = vmul.f32 %v143, 0.01
    %v148 = vsel %vm146, %v143, %v147
    %v149 = vld [vmem:[#allocation7] sm:$0xff]
    %v150 = vld [vmem:[#allocation7 + $0x8] sm:$0xff]
    %v151 = vld [vmem:[#allocation7 + $0x10] sm:$0xff]
    %v152 = vld [vmem:[#allocation7 + $0x18] sm:$0xff]
    %v153 = vld [vmem:[#allocation7 + $0x20] sm:$0xff]
    %v154 = vld [vmem:[#allocation7 + $0x28] sm:$0xff]
    %v155 = vld [vmem:[#allocation7 + $0x30] sm:$0xff]
    %v156 = vld [vmem:[#allocation7 + $0x38] sm:$0xff]
    %v157 = vld [vmem:[#allocation7 + $0x40] sm:$0xff]
    %v158 = vld [vmem:[#allocation7 + $0x48] sm:$0xff]
    %v159 = vld [vmem:[#allocation7 + $0x50] sm:$0xff]
    %v160 = vld [vmem:[#allocation7 + $0x58] sm:$0xff]
    %v161 = vld [vmem:[#allocation7 + $0x60] sm:$0xff]
    %v162 = vld [vmem:[#allocation7 + $0x68] sm:$0xff]
    %v163 = vld [vmem:[#allocation7 + $0x70] sm:$0xff]
    %v164 = vld [vmem:[#allocation7 + $0x78] sm:$0xff]
    %v165 = vld [vmem:[%s4] sm:$0x1]
    %v167 = vlaneseq
    %v168 = vshrl.u32 %v167, 7
    %v169 = vsub.s32 0, %v168
    %v170 = vrot.slane %v165, %v169
    %172 = vmatprep.subr.mxu0 0.0
    %173 = vmatpush1.msra.mxu0 %v149
    %174 = vmatprep.subr.mxu0 0.0
    %175 = vmatpush1.msra.mxu0 %v150
    %176 = vmatprep.subr.mxu0 0.0
    %177 = vmatpush1.msra.mxu0 %v151
    %178 = vmatprep.subr.mxu0 0.0
    %179 = vmatpush1.msra.mxu0 %v152
    %180 = vmatprep.subr.mxu0 0.0
    %181 = vmatpush1.msra.mxu0 %v153
    %182 = vmatprep.subr.mxu0 0.0
    %183 = vmatpush1.msra.mxu0 %v154
    %184 = vmatprep.subr.mxu0 0.0
    %185 = vmatpush1.msra.mxu0 %v155
    %186 = vmatprep.subr.mxu0 0.0
    %187 = vmatpush1.msra.mxu0 %v156
    %188 = vmatprep.subr.mxu0 0.0
    %189 = vmatpush1.msra.mxu0 %v157
    %190 = vmatprep.subr.mxu0 0.0
    %191 = vmatpush1.msra.mxu0 %v158
    %192 = vmatprep.subr.mxu0 0.0
    %193 = vmatpush1.msra.mxu0 %v159
    %194 = vmatprep.subr.mxu0 0.0
    %195 = vmatpush1.msra.mxu0 %v160
    %196 = vmatprep.subr.mxu0 0.0
    %197 = vmatpush1.msra.mxu0 %v161
    %198 = vmatprep.subr.mxu0 0.0
    %199 = vmatpush1.msra.mxu0 %v162
    %200 = vmatprep.subr.mxu0 0.0
    %201 = vmatpush1.msra.mxu0 %v163
    %202 = vmatprep.subr.mxu0 0.0
    %203 = vmatpush1.msra.mxu0 %v164
    %204 = vmatprep.subr.mxu0 0.0
    %205 = vmatpush1.msra.mxu0 0.0
    %206 = vmatprep.subr.mxu0 0.0
    %207 = vmatpush1.msra.mxu0 0.0
    %208 = vmatprep.subr.mxu0 0.0
    %209 = vmatpush1.msra.mxu0 0.0
    %210 = vmatprep.subr.mxu0 0.0
    %211 = vmatpush1.msra.mxu0 0.0
    %212 = vmatprep.subr.mxu0 0.0
    %213 = vmatpush1.msra.mxu0 0.0
    %214 = vmatprep.subr.mxu0 0.0
    %215 = vmatpush1.msra.mxu0 0.0
    %216 = vmatprep.subr.mxu0 0.0
    %217 = vmatpush1.msra.mxu0 0.0
    %218 = vmatprep.subr.mxu0 0.0
    %219 = vmatpush1.msra.mxu0 0.0
    %220 = vmatprep.subr.mxu0 0.0
    %221 = vmatpush1.msra.mxu0 0.0
    %222 = vmatprep.subr.mxu0 0.0
    %223 = vmatpush1.msra.mxu0 0.0
    %224 = vmatprep.subr.mxu0 0.0
    %225 = vmatpush1.msra.mxu0 0.0
    %226 = vmatprep.subr.mxu0 0.0
    %227 = vmatpush1.msra.mxu0 0.0
    %228 = vmatprep.subr.mxu0 0.0
    %229 = vmatpush1.msra.mxu0 0.0
    %230 = vmatprep.subr.mxu0 0.0
    %231 = vmatpush1.msra.mxu0 0.0
    %232 = vmatprep.subr.mxu0 0.0
    %233 = vmatpush1.msra.mxu0 0.0
    %234 = vmatprep.subr.mxu0 0.0
    %235 = vmatpush1.msra.mxu0 0.0
    %236 = vmatprep.mubr.f32.mxu0 0.0
    %237 = vmatmul.mubr.f32.gmra.mrb[0].mxu0 %v148
    %v238 = vpop.f32.mrb[0].mxu0
    %v239 = vadd.f32 %v170, %v238
    %v240 = vpop.f32.mrb[0].mxu0
    %241 = vdwg.mxu0
    %242 = vst [vmem:[#allocation8] sm:$0xff] %v239
    // Predicated region
    $region34: #{tpu_custom_call.1} parent=1 // pred_check
      _
    $region35: #{tpu_custom_call.1} parent=1 // pred_check_branch
      %244 = sbr.rel (0) target = $region37
    $region36: #{tpu_custom_call.1} parent=1 // pred_region
      %s246 = ssub.s32 128, 128
      %247 = vsyncadd [#allocation4], %s246
      %s249 = sshll.u32 [#allocation8], 4
      %s250 = int_to_ptr.vmem [resolvable:$true] %s249
      %252 = dma.vmem_to_hbm [thread:$0]  %s250, 128, %s5, [#allocation4]
    $region37: #{tpu_custom_call.1} parent=1 // pred_fallthru
      _
    // Predicated region
    $region38: #{tpu_custom_call.1} parent=1 // pred_check
      _
    $region39: #{tpu_custom_call.1} parent=1 // pred_check_branch
      %254 = sbr.rel (0) target = $region41
    $region40: #{tpu_custom_call.1} parent=1 // pred_region
      %255 = dma.done [#allocation4], 128
    $region41: #{tpu_custom_call.1} parent=1 // pred_fallthru
      _
    %256 = vsyncpa [#allocation3], 1
    %257 = vsyncpa [#allocation6], 1
    %258 = vsyncpa [#allocation4], 1

</llo_original>
